<compile_context>
chip_gen: v7x
topology: tpu7x:2x2x1
jax: 0.10.0
libtpu: 0.0.40
codegen_flags: <defaults>
</compile_context>

<pallas_src>
import jax
import jax.numpy as jnp
from jax.experimental import pallas as pl
from jax.experimental.pallas import tpu as pltpu

_LANE = 128     # lane width (last-dim vector unit)
_SUBLANE = 8    # f32/int32 sublane count


def _round_up(x, m):
    return ((x + m - 1) // m) * m


def _char_embedding_kernel(idx_ref, table_ref, out_ref):
    """Gather rows of `table_ref` selected by `idx_ref` via one-hot @ table.

    idx_ref:   (TT, 1)     int32   — token indices for this tile
    table_ref: (V_pad, E)  float32 — full padded table, resident in VMEM
    out_ref:   (TT, E)              — gathered embeddings for this tile
    """
    idx = idx_ref[...]                                            # (TT, 1)
    tt = idx.shape[0]
    v = table_ref.shape[0]
    lane_ids = jax.lax.broadcasted_iota(jnp.int32, (tt, v), 1)    # (TT, V_pad)
    onehot = (lane_ids == idx).astype(table_ref.dtype)            # 0/1 selector
    out_ref[...] = jnp.dot(
        onehot, table_ref[...], preferred_element_type=jnp.float32
    ).astype(out_ref.dtype)


def char_embedding(x, table, *, token_tile=1024, out_dtype=None):
    """Pallas equivalent of CharEmbedding.forward(x).

    Args:
      x:          (B, S) integer indices.
      table:      (V, E) embedding weights (padding row already zeroed;
                  preferably V already padded to a multiple of 128 at init).
      token_tile: target tokens per grid step (adaptively clamped / rounded).
      out_dtype:  output dtype (defaults to table dtype; pass jnp.bfloat16 to
                  halve output writeback if downstream runs in bf16).
    Returns:
      (B, S, E) embeddings.
    """
    B, S = x.shape
    V, E = table.shape
    T = B * S
    out_dtype = table.dtype if out_dtype is None else out_dtype

    # Fallback vocab pad (normally already done once in make_embedding_table).
    V_pad = _round_up(V, _LANE)
    if V_pad != V:
        table = jnp.pad(table, ((0, V_pad - V), (0, 0)))

    # Adaptive token tile: big enough to amortize per-step overhead for large
    # T, clamped for tiny inputs, always a sublane multiple, never larger than
    # the (8-aligned) token count so blocks stay within the array (the tail
    # block may be partial; Pallas masks its writeback).
    tile = int(token_tile)
    if T >= _SUBLANE:
        tile = max(_SUBLANE, min(tile, (T // _SUBLANE) * _SUBLANE))
    else:
        tile = _SUBLANE
    tile = _round_up(tile, _SUBLANE)
    n_tiles = pl.cdiv(T, tile)

    idx_flat = x.reshape(T, 1).astype(jnp.int32)

    # Explicit VMEM budget: 2x double-buffered output, 2x lane-padded (to 128
    # lanes) idx buffers, 1x resident table, plus headroom.  Matters on v5e
    # (16 MiB scoped default) and v7x (64 MiB physical) when tiles grow.
    out_buf = tile * E * jnp.dtype(out_dtype).itemsize
    idx_buf = tile * _LANE * 4
    tab_buf = V_pad * E * jnp.dtype(table.dtype).itemsize
    vmem_bytes = 2 * out_buf + 2 * idx_buf + tab_buf
    vmem_limit = int(min(max(2 * vmem_bytes + (4 << 20), 32 << 20), 64 << 20))

    cost = pl.CostEstimate(
        flops=2 * T * V_pad * E,
        transcendentals=0,
        bytes_accessed=4 * T + T * E * jnp.dtype(out_dtype).itemsize + tab_buf,
    )

    out_flat = pl.pallas_call(
        _char_embedding_kernel,
        out_shape=jax.ShapeDtypeStruct((T, E), out_dtype),
        grid=(n_tiles,),
        in_specs=[
            # Per-tile index column.
            pl.BlockSpec((tile, 1), lambda i: (i, 0)),
            # Full table, constant index_map (fetched once, not re-DMA'd) and
            # single-buffered: halves its VMEM footprint (matters on v7x).
            pl.BlockSpec((V_pad, E), lambda i: (0, 0),
                         pipeline_mode=pl.Buffered(1)),
        ],
        out_specs=pl.BlockSpec((tile, E), lambda i: (i, 0)),
        compiler_params=pltpu.CompilerParams(
            dimension_semantics=("parallel",),   # megacore sharding on v7x
            vmem_limit_bytes=vmem_limit,
        ),
        cost_estimate=cost,
    )(idx_flat, table)

    # (T, E) -> (B, S, E) is a contiguous, metadata-only reshape.
    return out_flat.reshape(B, S, E)


def make_embedding_table(key, input_size, embed_size, padding_idx, *, pad_vocab=True):
    """nn.Embedding-style init: N(0,1), padding row zeroed, vocab lane-padded.

    The pad to a multiple of 128 is done once here (hoisted out of the forward
    wrapper).  Padded rows are zero and never indexed, so results match the
    unpadded table exactly.
    """
    w = jax.random.normal(key, (input_size, embed_size), dtype=jnp.float32)
    w = w.at[padding_idx].set(0.0)
    if pad_vocab:
        v_pad = _round_up(input_size, _LANE)
        if v_pad != input_size:
            w = jnp.pad(w, ((0, v_pad - input_size), (0, 0)))
    return w


# TODO(synk): for vocabularies well beyond char scale (V_pad >~ 1-2K), switch
# to a scalar-prefetch DMA row-gather (PrefetchScalarGridSpec + pl.Element)
# instead of one-hot@MXU; the one-hot build and matmul K dim grow with V while
# useful bytes do not (crossover earliest on v5e).

if __name__ == "__main__":
    # Small shapes consistent with a character-embedding forward pass.
    B, S = 2, 8          # batch, sequence length  (B*S = 16 tokens)
    V, E = 64, 128       # vocab size (input_size), embed_size
    PADDING_IDX = 0      # models hps.vocab.find('P') with vocab starting at 'P'

    key = jax.random.PRNGKey(0)
    k_tab, k_idx, k_idx2 = jax.random.split(key, 3)

    table = make_embedding_table(k_tab, V, E, PADDING_IDX)   # (128, 128) padded
    x = jax.random.randint(k_idx, (B, S), minval=0, maxval=V, dtype=jnp.int32)
    x = x.at[0, 0].set(PADDING_IDX)   # ensure the zero-row path is exercised

    out = jax.block_until_ready(char_embedding(x, table))
    ref = table[x]                    # plain JAX gather == torch lookup
    assert out.shape == (B, S, E)
    assert jnp.allclose(out, ref), "mismatch vs. reference gather"
    assert jnp.all(out[0, 0] == 0.0), "padding row must be zero"

    # Non-divisible token count: cdiv grid + Pallas-masked partial tail block
    # (no wrapper pad, no post-kernel slice).
    B2, S2 = 3, 100      # T = 300
    x2 = jax.random.randint(k_idx2, (B2, S2), minval=0, maxval=V, dtype=jnp.int32)
    out2 = jax.block_until_ready(char_embedding(x2, table))
    assert out2.shape == (B2, S2, E)
    assert jnp.allclose(out2, table[x2]), "mismatch vs. reference gather (tail case)"

    print("KERNEL_OK")
</pallas_src>

<mosaic_0001>
module attributes {stable_mosaic.version = 11 : i64} {
  func.func @_char_embedding_kernel(%arg0: i32, %arg1: memref<16x1xi32, #tpu.memory_space<vmem>>, %arg2: memref<128x128xf32, #tpu.memory_space<vmem>>, %arg3: memref<16x128xf32, #tpu.memory_space<vmem>>) attributes {dimension_semantics = [#tpu.dimension_semantics<parallel>], iteration_bounds = array<i64: 1>, scalar_prefetch = 0 : i64, scratch_operands = 0 : i64, tpu.core_type = #tpu.core_type<tc>, window_params = [{transform_indices = @transform_0, window_bounds = array<i64: 16, 1>}, {pipeline_mode = #tpu.pipeline_mode<synchronous>, transform_indices = @transform_1, window_bounds = array<i64: 128, 128>}, {transform_indices = @transform_2, window_bounds = array<i64: 16, 128>}]} {
    %c0 = arith.constant 0 : index
    %c0_0 = arith.constant 0 : index
    %0 = vector.load %arg1[%c0, %c0_0] : memref<16x1xi32, #tpu.memory_space<vmem>>, vector<16x1xi32>
    %1 = tpu.iota {dimensions = array<i32: 1>} : vector<16x128xi32>
    %2 = vector.broadcast %0 : vector<16x1xi32> to vector<16x128xi32>
    %3 = arith.cmpi eq, %1, %2 : vector<16x128xi32>
    %4 = arith.extui %3 : vector<16x128xi1> to vector<16x128xi32>
    %5 = arith.sitofp %4 : vector<16x128xi32> to vector<16x128xf32>
    %c0_1 = arith.constant 0 : index
    %c0_2 = arith.constant 0 : index
    %6 = vector.load %arg2[%c0_1, %c0_2] : memref<128x128xf32, #tpu.memory_space<vmem>>, vector<128x128xf32>
    %cst = arith.constant dense<0.000000e+00> : vector<16x128xf32>
    %7 = tpu.matmul %5, %6, %cst {dimension_numbers = #tpu.dot_dimension_numbers<[1], [0], [0], [1], [0, 0, 1, 1], [], []>} : vector<16x128xf32>, vector<128x128xf32>, vector<16x128xf32> -> vector<16x128xf32>
    %c0_3 = arith.constant 0 : index
    %c0_4 = arith.constant 0 : index
    %8 = vector.load %arg3[%c0_3, %c0_4] : memref<16x128xf32, #tpu.memory_space<vmem>>, vector<16x128xf32>
    tpu.vector_store %arg3[%c0_3, %c0_4], %7 {strides = array<i32>} : memref<16x128xf32, #tpu.memory_space<vmem>>, vector<16x128xf32>,
    return
  }
  func.func @transform_0(%arg0: i32) -> (i32, i32) {
    %c0_i32 = arith.constant 0 : i32
    %c0_i32_0 = arith.constant 0 : i32
    return %arg0, %c0_i32 : i32, i32
  }
  func.func @transform_1(%arg0: i32) -> (i32, i32) {
    %c0_i32 = arith.constant 0 : i32
    %c0_i32_0 = arith.constant 0 : i32
    %c0_i32_1 = arith.constant 0 : i32
    return %c0_i32, %c0_i32_0 : i32, i32
  }
  func.func @transform_2(%arg0: i32) -> (i32, i32) {
    %c0_i32 = arith.constant 0 : i32
    %c0_i32_0 = arith.constant 0 : i32
    return %arg0, %c0_i32 : i32, i32
  }
}

</mosaic_0001>

<llo_original>
// kernel: tpu_custom_call.1
$region0: #{tpu_custom_call.1}
  #allocation0 [shape = 'u32[]', space=smem, size = 0x4, offset = 0x4, fixed_abs, tag = 'smem constant byte address 0x4 - core index']
  #allocation1 [shape = 'u32[144,128]{1,0:T(1,128)}', space=vmem, size = 0x12000, scoped, tag = 'internal scratch']
  %s0 = inlined_call_operand.vmem [shape: s32[16,1], index: 0, kind: input, shape index: {}]
  %s1 = inlined_call_operand.hbm [shape: f32[128,128], index: 1, kind: input, shape index: {}]
  %s2 = inlined_call_operand.hbm [shape: f32[16,128], index: 2, kind: output, shape index: {}]
  %s3 = sld [smem:[#allocation0]]
  $region22: #{tpu_custom_call.1} parent=0
    _
  %s5 = ssub.s32 1, %s3
  %s6 = scalar_select 0, %s5, %s3
  $region1: #{tpu_custom_call.1} parent=0
    #allocation2 [shape = 'u8[65536]{0}', space=vmem, size = 0x10000, scoped, tag = 'input window, operand 1, single buffered']
    #allocation3 [shape = 's32[1]{0}', space=sflag, size = 0x4, scoped, tag = 'scoped memory for tpu_custom_call.1']
    #allocation4 [shape = 's32[1]{0}', space=sflag, size = 0x4, scoped, tag = 'scoped memory for tpu_custom_call.1']
    #allocation5 [shape = 'u8[8192]{0}', space=vmem, size = 0x2000, scoped, tag = 'output window, operand 0, single buffered']
    %7 = vsyncpa [#allocation3], 0
    %8 = vsyncpa [#allocation4], 0
    // Predicated region
    $region2: #{tpu_custom_call.1} parent=1 // pred_check
      _
    $region3: #{tpu_custom_call.1} parent=1 // pred_check_branch
      %10 = sbr.rel (0) target = $region5
    $region4: #{tpu_custom_call.1} parent=1 // pred_region
      _
    $region5: #{tpu_custom_call.1} parent=1 // pred_fallthru
      _
    // Predicated region
    $region6: #{tpu_custom_call.1} parent=1 // pred_check
      _
    $region7: #{tpu_custom_call.1} parent=1 // pred_check_branch
      %12 = sbr.rel (0) target = $region9
    $region8: #{tpu_custom_call.1} parent=1 // pred_region
      %s14 = ssub.s32 2048, 2048
      %15 = vsyncadd [#allocation3], %s14
      %s16 = sshll.u32 [#allocation2], 4
      %s17 = int_to_ptr.vmem [resolvable:$true] %s16
      %22 = dma.hbm_to_vmem [thread:$0]  %s1, 2048, %s17, [#allocation3], 128, 128, 8
    $region9: #{tpu_custom_call.1} parent=1 // pred_fallthru
      _
    // Predicated region
    $region10: #{tpu_custom_call.1} parent=1 // pred_check
      _
    $region11: #{tpu_custom_call.1} parent=1 // pred_check_branch
      %24 = sbr.rel (0) target = $region13
    $region12: #{tpu_custom_call.1} parent=1 // pred_region
      %25 = dma.done [#allocation3], 2048
    $region13: #{tpu_custom_call.1} parent=1 // pred_fallthru
      _
    %v26 = vld [vmem:[%s0] sm:$0xff]
    %v27 = vld [vmem:[%s0 + $0x8] sm:$0xff]
    %v28 = vlaneseq
    %v29 = vand.u32 %v28, 127
    %30 = vset.pattern.permute.xlu0 0
    %31 = vperm.xlu0 %30, %v26
    %v32 = vpop.permute.xlu0 %31
    %33 = vset.pattern.permute.xlu0 0
    %34 = vperm.xlu0 %33, %v27
    %v35 = vpop.permute.xlu0 %34
    %vm36 = vcmp.eq.s32.totalorder %v29, %v32
    %vm37 = vcmp.eq.s32.totalorder %v29, %v35
    %v38 = vsel %vm36, 1, 0
    %v39 = vsel %vm37, 1, 0
    %v40 = vcvt.s32.f32 %v38
    %v41 = vcvt.s32.f32 %v39
    %v42 = vld [vmem:[#allocation2] sm:$0xff]
    %v43 = vld [vmem:[#allocation2 + $0x8] sm:$0xff]
    %v44 = vld [vmem:[#allocation2 + $0x10] sm:$0xff]
    %v45 = vld [vmem:[#allocation2 + $0x18] sm:$0xff]
    %v46 = vld [vmem:[#allocation2 + $0x20] sm:$0xff]
    %v47 = vld [vmem:[#allocation2 + $0x28] sm:$0xff]
    %v48 = vld [vmem:[#allocation2 + $0x30] sm:$0xff]
    %v49 = vld [vmem:[#allocation2 + $0x38] sm:$0xff]
    %v50 = vld [vmem:[#allocation2 + $0x40] sm:$0xff]
    %v51 = vld [vmem:[#allocation2 + $0x48] sm:$0xff]
    %v52 = vld [vmem:[#allocation2 + $0x50] sm:$0xff]
    %v53 = vld [vmem:[#allocation2 + $0x58] sm:$0xff]
    %v54 = vld [vmem:[#allocation2 + $0x60] sm:$0xff]
    %v55 = vld [vmem:[#allocation2 + $0x68] sm:$0xff]
    %v56 = vld [vmem:[#allocation2 + $0x70] sm:$0xff]
    %v57 = vld [vmem:[#allocation2 + $0x78] sm:$0xff]
    %58 = vmatprep.subr.mxu0 0.0
    %59 = vmatpush1.msra.mxu0 %v42
    %60 = vmatprep.subr.mxu0 0.0
    %61 = vmatpush1.msra.mxu0 %v43
    %62 = vmatprep.subr.mxu0 0.0
    %63 = vmatpush1.msra.mxu0 %v44
    %64 = vmatprep.subr.mxu0 0.0
    %65 = vmatpush1.msra.mxu0 %v45
    %66 = vmatprep.subr.mxu0 0.0
    %67 = vmatpush1.msra.mxu0 %v46
    %68 = vmatprep.subr.mxu0 0.0
    %69 = vmatpush1.msra.mxu0 %v47
    %70 = vmatprep.subr.mxu0 0.0
    %71 = vmatpush1.msra.mxu0 %v48
    %72 = vmatprep.subr.mxu0 0.0
    %73 = vmatpush1.msra.mxu0 %v49
    %74 = vmatprep.subr.mxu0 0.0
    %75 = vmatpush1.msra.mxu0 %v50
    %76 = vmatprep.subr.mxu0 0.0
    %77 = vmatpush1.msra.mxu0 %v51
    %78 = vmatprep.subr.mxu0 0.0
    %79 = vmatpush1.msra.mxu0 %v52
    %80 = vmatprep.subr.mxu0 0.0
    %81 = vmatpush1.msra.mxu0 %v53
    %82 = vmatprep.subr.mxu0 0.0
    %83 = vmatpush1.msra.mxu0 %v54
    %84 = vmatprep.subr.mxu0 0.0
    %85 = vmatpush1.msra.mxu0 %v55
    %86 = vmatprep.subr.mxu0 0.0
    %87 = vmatpush1.msra.mxu0 %v56
    %88 = vmatprep.subr.mxu0 0.0
    %89 = vmatpush1.msra.mxu0 %v57
    %90 = vmatprep.subr.mxu0 0.0
    %91 = vmatpush1.msra.mxu0 0.0
    %92 = vmatprep.subr.mxu0 0.0
    %93 = vmatpush1.msra.mxu0 0.0
    %94 = vmatprep.subr.mxu0 0.0
    %95 = vmatpush1.msra.mxu0 0.0
    %96 = vmatprep.subr.mxu0 0.0
    %97 = vmatpush1.msra.mxu0 0.0
    %98 = vmatprep.subr.mxu0 0.0
    %99 = vmatpush1.msra.mxu0 0.0
    %100 = vmatprep.subr.mxu0 0.0
    %101 = vmatpush1.msra.mxu0 0.0
    %102 = vmatprep.subr.mxu0 0.0
    %103 = vmatpush1.msra.mxu0 0.0
    %104 = vmatprep.subr.mxu0 0.0
    %105 = vmatpush1.msra.mxu0 0.0
    %106 = vmatprep.subr.mxu0 0.0
    %107 = vmatpush1.msra.mxu0 0.0
    %108 = vmatprep.subr.mxu0 0.0
    %109 = vmatpush1.msra.mxu0 0.0
    %110 = vmatprep.subr.mxu0 0.0
    %111 = vmatpush1.msra.mxu0 0.0
    %112 = vmatprep.subr.mxu0 0.0
    %113 = vmatpush1.msra.mxu0 0.0
    %114 = vmatprep.subr.mxu0 0.0
    %115 = vmatpush1.msra.mxu0 0.0
    %116 = vmatprep.subr.mxu0 0.0
    %117 = vmatpush1.msra.mxu0 0.0
    %118 = vmatprep.subr.mxu0 0.0
    %119 = vmatpush1.msra.mxu0 0.0
    %120 = vmatprep.subr.mxu0 0.0
    %121 = vmatpush1.msra.mxu0 0.0
    %122 = vmatprep.mubr.f32.mxu0 0.0
    %123 = vmatmul.mubr.f32.gmra.mrb[0].mxu0 %v40
    %v124 = vpop.f32.mrb[0].mxu0
    %v125 = vadd.f32 0.0, %v124
    %v126 = vpop.f32.mrb[0].mxu0
    %127 = vmatprep.mubr.f32.mxu0 0.0
    %128 = vmatmul.mubr.f32.gmra.mrb[0].mxu0 %v41
    %v129 = vpop.f32.mrb[0].mxu0
    %v130 = vadd.f32 0.0, %v129
    %v131 = vpop.f32.mrb[0].mxu0
    %132 = vdwg.mxu0
    %133 = vst [vmem:[#allocation5] sm:$0xff] %v125
    %134 = vst [vmem:[#allocation5 + $0x8] sm:$0xff] %v130
    // Predicated region
    $region14: #{tpu_custom_call.1} parent=1 // pred_check
      _
    $region15: #{tpu_custom_call.1} parent=1 // pred_check_branch
      %136 = sbr.rel (0) target = $region17
    $region16: #{tpu_custom_call.1} parent=1 // pred_region
      %s138 = ssub.s32 256, 256
      %139 = vsyncadd [#allocation4], %s138
      %s140 = sshll.u32 [#allocation5], 4
      %s141 = int_to_ptr.vmem [resolvable:$true] %s140
      %146 = dma.vmem_to_hbm [thread:$0]  %s141, 256, %s2, [#allocation4], 128, 128, 8
    $region17: #{tpu_custom_call.1} parent=1 // pred_fallthru
      _
    // Predicated region
    $region18: #{tpu_custom_call.1} parent=1 // pred_check
      _
    $region19: #{tpu_custom_call.1} parent=1 // pred_check_branch
      %148 = sbr.rel (0) target = $region21
    $region20: #{tpu_custom_call.1} parent=1 // pred_region
      %149 = dma.done [#allocation4], 256
    $region21: #{tpu_custom_call.1} parent=1 // pred_fallthru
      _
    %150 = vsyncpa [#allocation3], 1
    %151 = vsyncpa [#allocation4], 1

</llo_original>
